<compile_context>
chip_gen: v7x
topology: tpu7x:2x2x1
jax: 0.10.0
libtpu: 0.0.40
codegen_flags: <defaults>
</compile_context>

<pallas_src>
import functools

import jax
import jax.numpy as jnp
from jax.experimental import pallas as pl
from jax.experimental.pallas import tpu as pltpu


def _round_up(x, m):
    return (x + m - 1) // m * m


def _in_trust_kernel(logits_ref, labels_ref, ce_ref, dce_ref, *, delta):
    x = logits_ref[...].astype(jnp.float32)       # (T, C)
    labels = labels_ref[...]                      # (T, 1) int32
    t, c = x.shape

    col = jax.lax.broadcasted_iota(jnp.int32, (t, c), 1)
    is_label = col == labels                      # one-hot mask

    # --- numerically stable softmax pieces ---
    m = jnp.max(x, axis=1, keepdims=True)         # (T, 1)
    e = jnp.exp(x - m)                            # (T, C), <= 1
    s = jnp.sum(e, axis=1, keepdims=True)         # (T, 1)

    # --- cross-entropy per row: logsumexp - logit_at_label ---
    x_label = jnp.sum(jnp.where(is_label, x, 0.0), axis=1, keepdims=True)
    ce_ref[...] = (jnp.log(s) + m) - x_label

    # --- DCE term ---
    # divide -> per-row reciprocal (EUP) + broadcast multiply.
    # (approx=True would use the fast vrcp but costs ~1e-4 rel. error; keep
    #  the exact form so we match the reference to ~1e-6.)
    pred = jnp.maximum(e * pl.reciprocal(s), jnp.float32(1e-7))   # softmax <= 1
    # one_hot clamped to [1e-4, 1] with the (1-delta) factor folded in.
    bias = jnp.where(is_label,
                     jnp.float32(1.0 - delta),
                     jnp.float32(1e-4 * (1.0 - delta)))
    inner = pred * jnp.float32(delta) + bias
    dce_ref[...] = -jnp.sum(pred * jnp.log(inner), axis=1, keepdims=True)


def in_trust_loss(logits, labels, *, alpha=1.0, beta=0.8, delta=0.5,
                  num_classes=35, tile_n=8192):
    """JAX/Pallas equivalent of In_trust_Loss.forward."""
    logits = jnp.asarray(logits).reshape(-1, num_classes).astype(jnp.float32)
    labels = jnp.asarray(labels).reshape(-1, 1).astype(jnp.int32)
    n = logits.shape[0]

    # Row-tile size: multiple of 8 (sublanes) when tiling; if a single block
    # covers everything, use the exact row count (block dim == array dim is
    # always legal).  tile_n=8192 @ C=35 f32 ~= 1.1 MiB/buffer -> fits the
    # 32 MiB scoped VMEM with double buffering on v5e/v6e/v7x.
    if n <= tile_n:
        tn = n
    else:
        tn = _round_up(min(tile_n, n), 8)
    num_tiles = pl.cdiv(n, tn)

    kernel = functools.partial(_in_trust_kernel, delta=float(delta))

    grid_spec = pltpu.PrefetchScalarGridSpec(
        num_scalar_prefetch=0,
        grid=(num_tiles,),
        in_specs=[
            pl.BlockSpec((tn, num_classes), lambda i: (i, 0)),   # logits tile
            pl.BlockSpec((tn, 1), lambda i: (i, 0)),             # labels tile
        ],
        out_specs=[
            pl.BlockSpec((tn, 1), lambda i: (i, 0)),             # per-row CE
            pl.BlockSpec((tn, 1), lambda i: (i, 0)),             # per-row DCE
        ],
    )

    ce_rows, dce_rows = pl.pallas_call(
        kernel,
        grid_spec=grid_spec,
        out_shape=(
            jax.ShapeDtypeStruct((n, 1), jnp.float32),
            jax.ShapeDtypeStruct((n, 1), jnp.float32),
        ),
        compiler_params=pltpu.CompilerParams(
            dimension_semantics=("parallel",),
            vmem_limit_bytes=32 * 1024 * 1024,
        ),
    )(logits, labels)

    ce = jnp.sum(ce_rows) / n       # CrossEntropyLoss(reduction='mean')
    dce = jnp.sum(dce_rows) / n     # dce.mean()
    return alpha * ce - beta * dce


def _reference(logits, labels, *, alpha=1.0, beta=0.8, delta=0.5, num_classes=35):
    logits = jnp.asarray(logits).reshape(-1, num_classes).astype(jnp.float32)
    labels = jnp.asarray(labels).reshape(-1)
    logp = jax.nn.log_softmax(logits, axis=1)
    ce = -jnp.mean(jnp.take_along_axis(logp, labels[:, None], axis=1))
    pred = jnp.clip(jax.nn.softmax(logits, axis=1), 1e-7, 1.0)
    onehot = jnp.clip(jax.nn.one_hot(labels, num_classes), 1e-4, 1.0)
    dce = -jnp.sum(pred * jnp.log(pred * delta + onehot * (1 - delta)), axis=1)
    return alpha * ce - beta * jnp.mean(dce)


if __name__ == "__main__":
    num_classes = 35
    key = jax.random.PRNGKey(0)

    # (batch, tile_n override) — exercises: single exact block, multi-tile grid
    # with a masked edge block, and a single odd-sized (non-multiple-of-8) block.
    cases = [(8, None), (20, 8), (13, None)]

    for batch, tn in cases:
        key, k1, k2 = jax.random.split(key, 3)
        logits = jax.random.normal(k1, (batch, num_classes), dtype=jnp.float32)
        labels = jax.random.randint(k2, (batch,), 0, num_classes, dtype=jnp.int32)

        kwargs = dict(alpha=1.0, beta=0.8, delta=0.5, num_classes=num_classes)
        if tn is not None:
            loss = in_trust_loss(logits, labels, tile_n=tn, **kwargs)
        else:
            loss = in_trust_loss(logits, labels, **kwargs)
        loss = jax.block_until_ready(loss)

        ref = _reference(logits, labels, **kwargs)
        assert jnp.allclose(loss, ref, atol=1e-5, rtol=1e-5), (batch, loss, ref)

    print("KERNEL_OK")
</pallas_src>

<mosaic_0001>
module attributes {stable_mosaic.version = 11 : i64} {
  func.func @_in_trust_kernel(%arg0: i32, %arg1: memref<8x35xf32, #tpu.memory_space<vmem>>, %arg2: memref<8x1xi32, #tpu.memory_space<vmem>>, %arg3: memref<8x1xf32, #tpu.memory_space<vmem>>, %arg4: memref<8x1xf32, #tpu.memory_space<vmem>>) attributes {dimension_semantics = [#tpu.dimension_semantics<parallel>], iteration_bounds = array<i64: 1>, scalar_prefetch = 0 : i64, scratch_operands = 0 : i64, tpu.core_type = #tpu.core_type<tc>, window_params = [{transform_indices = @transform_0, window_bounds = array<i64: 8, 35>}, {transform_indices = @transform_1, window_bounds = array<i64: 8, 1>}, {transform_indices = @transform_2, window_bounds = array<i64: 8, 1>}, {transform_indices = @transform_3, window_bounds = array<i64: 8, 1>}]} {
    %c0 = arith.constant 0 : index
    %c0_0 = arith.constant 0 : index
    %0 = vector.load %arg1[%c0, %c0_0] : memref<8x35xf32, #tpu.memory_space<vmem>>, vector<8x35xf32>
    %c0_1 = arith.constant 0 : index
    %c0_2 = arith.constant 0 : index
    %1 = vector.load %arg2[%c0_1, %c0_2] : memref<8x1xi32, #tpu.memory_space<vmem>>, vector<8x1xi32>
    %2 = tpu.iota {dimensions = array<i32: 1>} : vector<8x35xi32>
    %3 = vector.broadcast %1 : vector<8x1xi32> to vector<8x35xi32>
    %4 = arith.cmpi eq, %2, %3 : vector<8x35xi32>
    %cst = arith.constant dense<0xFF800000> : vector<8xf32>
    %5 = vector.multi_reduction <maximumf>, %0, %cst [1] : vector<8x35xf32> to vector<8xf32>
    %6 = vector.shape_cast %5 : vector<8xf32> to vector<8x1xf32>
    %7 = vector.broadcast %6 : vector<8x1xf32> to vector<8x35xf32>
    %8 = arith.subf %0, %7 : vector<8x35xf32>
    %9 = math.exp %8 : vector<8x35xf32>
    %cst_3 = arith.constant dense<0.000000e+00> : vector<8xf32>
    %10 = vector.multi_reduction <add>, %9, %cst_3 [1] : vector<8x35xf32> to vector<8xf32>
    %11 = vector.shape_cast %10 : vector<8xf32> to vector<8x1xf32>
    %cst_4 = arith.constant 0.000000e+00 : f32
    %12 = vector.broadcast %cst_4 : f32 to vector<8x35xf32>
    %13 = arith.select %4, %0, %12 : vector<8x35xi1>, vector<8x35xf32>
    %cst_5 = arith.constant dense<0.000000e+00> : vector<8xf32>
    %14 = vector.multi_reduction <add>, %13, %cst_5 [1] : vector<8x35xf32> to vector<8xf32>
    %15 = vector.shape_cast %14 : vector<8xf32> to vector<8x1xf32>
    %16 = math.log %11 : vector<8x1xf32>
    %17 = arith.addf %16, %6 : vector<8x1xf32>
    %18 = arith.subf %17, %15 : vector<8x1xf32>
    %c0_6 = arith.constant 0 : index
    %c0_7 = arith.constant 0 : index
    %19 = vector.load %arg3[%c0_6, %c0_7] : memref<8x1xf32, #tpu.memory_space<vmem>>, vector<8x1xf32>
    tpu.vector_store %arg3[%c0_6, %c0_7], %18 {strides = array<i32>} : memref<8x1xf32, #tpu.memory_space<vmem>>, vector<8x1xf32>,
    %20 = tpu.reciprocal %11 : vector<8x1xf32> -> vector<8x1xf32>
    %21 = vector.broadcast %20 : vector<8x1xf32> to vector<8x35xf32>
    %22 = arith.mulf %9, %21 : vector<8x35xf32>
    %cst_8 = arith.constant 1.000000e-07 : f32
    %23 = vector.broadcast %cst_8 : f32 to vector<8x35xf32>
    %24 = arith.maximumf %22, %23 : vector<8x35xf32>
    %cst_9 = arith.constant 5.000000e-01 : f32
    %cst_10 = arith.constant 5.000000e-05 : f32
    %25 = vector.broadcast %cst_9 : f32 to vector<8x35xf32>
    %26 = vector.broadcast %cst_10 : f32 to vector<8x35xf32>
    %27 = arith.select %4, %25, %26 : vector<8x35xi1>, vector<8x35xf32>
    %cst_11 = arith.constant 5.000000e-01 : f32
    %28 = vector.broadcast %cst_11 : f32 to vector<8x35xf32>
    %29 = arith.mulf %24, %28 : vector<8x35xf32>
    %30 = arith.addf %29, %27 : vector<8x35xf32>
    %31 = math.log %30 : vector<8x35xf32>
    %32 = arith.mulf %24, %31 : vector<8x35xf32>
    %cst_12 = arith.constant dense<0.000000e+00> : vector<8xf32>
    %33 = vector.multi_reduction <add>, %32, %cst_12 [1] : vector<8x35xf32> to vector<8xf32>
    %34 = vector.shape_cast %33 : vector<8xf32> to vector<8x1xf32>
    %cst_13 = arith.constant 0.000000e+00 : f32
    %35 = vector.broadcast %cst_13 : f32 to vector<8x1xf32>
    %36 = arith.subf %35, %34 : vector<8x1xf32>
    %c0_14 = arith.constant 0 : index
    %c0_15 = arith.constant 0 : index
    %37 = vector.load %arg4[%c0_14, %c0_15] : memref<8x1xf32, #tpu.memory_space<vmem>>, vector<8x1xf32>
    tpu.vector_store %arg4[%c0_14, %c0_15], %36 {strides = array<i32>} : memref<8x1xf32, #tpu.memory_space<vmem>>, vector<8x1xf32>,
    return
  }
  func.func @transform_0(%arg0: i32) -> (i32, i32) {
    %c0_i32 = arith.constant 0 : i32
    %c0_i32_0 = arith.constant 0 : i32
    return %arg0, %c0_i32 : i32, i32
  }
  func.func @transform_1(%arg0: i32) -> (i32, i32) {
    %c0_i32 = arith.constant 0 : i32
    %c0_i32_0 = arith.constant 0 : i32
    return %arg0, %c0_i32 : i32, i32
  }
  func.func @transform_2(%arg0: i32) -> (i32, i32) {
    %c0_i32 = arith.constant 0 : i32
    %c0_i32_0 = arith.constant 0 : i32
    return %arg0, %c0_i32 : i32, i32
  }
  func.func @transform_3(%arg0: i32) -> (i32, i32) {
    %c0_i32 = arith.constant 0 : i32
    %c0_i32_0 = arith.constant 0 : i32
    return %arg0, %c0_i32 : i32, i32
  }
}

</mosaic_0001>

<llo_original>
// kernel: tpu_custom_call.1
$region0: #{tpu_custom_call.1}
  #allocation0 [shape = 'u32[]', space=smem, size = 0x4, offset = 0x4, fixed_abs, tag = 'smem constant byte address 0x4 - core index']
  #allocation1 [shape = 'u32[144,128]{1,0:T(1,128)}', space=vmem, size = 0x12000, scoped, tag = 'internal scratch']
  %s0 = inlined_call_operand.vmem [shape: f32[8,35], index: 0, kind: input, shape index: {}]
  %s1 = inlined_call_operand.vmem [shape: s32[8,1], index: 1, kind: input, shape index: {}]
  %s2 = inlined_call_operand.vmem [shape: f32[8,1], index: 2, kind: output, shape index: {0}]
  %s3 = inlined_call_operand.vmem [shape: f32[8,1], index: 3, kind: output, shape index: {1}]
  %4 = xla_tuple %s2, %s3
  %s5 = sld [smem:[#allocation0]]
  $region26: #{tpu_custom_call.1} parent=0
    _
  %s7 = ssub.s32 1, %s5
  %s8 = scalar_select 0, %s7, %s5
  // Predicated region
  $region2: #{tpu_custom_call.1} parent=0 // pred_check
    _
  $region3: #{tpu_custom_call.1} parent=0 // pred_check_branch
    %10 = sbr.rel (0) target = $region5
  $region4: #{tpu_custom_call.1} parent=0 // pred_region
    _
  $region5: #{tpu_custom_call.1} parent=0 // pred_fallthru
    _
  // Predicated region
  $region6: #{tpu_custom_call.1} parent=0 // pred_check
    _
  $region7: #{tpu_custom_call.1} parent=0 // pred_check_branch
    %12 = sbr.rel (0) target = $region9
  $region8: #{tpu_custom_call.1} parent=0 // pred_region
    _
  $region9: #{tpu_custom_call.1} parent=0 // pred_fallthru
    _
  %v13 = vld [vmem:[%s0] sm:$0xff]
  %v14 = vld [vmem:[%s1] sm:$0xff]
  %v15 = vlaneseq
  %v16 = vand.u32 %v15, 127
  %17 = vset.pattern.permute.xlu0 0
  %18 = vperm.xlu0 %17, %v14
  %v19 = vpop.permute.xlu0 %18
  %vm20 = vcmp.eq.s32.totalorder %v16, %v19
  %vm21 = vcmask 285696
  %v22 = vsel %vm21, %v13, -inf
  %23 = vmax.xlane.f32.xlu0 %v22
  %v24 = vpop.xlane.xlu0 %23
  %v25 = vsub.f32 %v13, %v24
  %v26 = vmul.f32 %v25, 1.442695
  %v27 = vpow.pop %v26
  %v28 = vsel %vm21, %v27, 0.0
  %29 = vadd.xlane.f32.xlu0 %v28
  %v30 = vpop.xlane.xlu0 %29
  %v31 = vsel %vm20, %v13, 0.0
  %v32 = vsel %vm21, %v31, 0.0
  %33 = vadd.xlane.f32.xlu0 %v32
  %v34 = vpop.xlane.xlu0 %33
  %v35 = vlog2.pop %v30
  %v36 = vmul.f32 %v35, 0.6931472
  %v37 = vadd.f32 %v36, %v24
  %v38 = vsub.f32 %v37, %v34
  %vm39 = vcmask 7168
  %40 = vst.msk [vmem:[%s2] sm:$0xff] %vm39, %v38
  %v41 = vrcp.pop %v30
  %v42 = vmul.f32 %v27, %v41
  %v43 = vmax.f32 %v42, 1e-07
  %v44 = vsel %vm20, 0.5, 5e-05
  %v45 = vmul.f32 %v43, 0.5
  %v46 = vadd.f32 %v45, %v44
  %v47 = vlog2.pop %v46
  %v48 = vmul.f32 %v47, 0.6931472
  %v49 = vmul.f32 %v43, %v48
  %v50 = vsel %vm21, %v49, 0.0
  %51 = vadd.xlane.f32.xlu0 %v50
  %v52 = vpop.xlane.xlu0 %51
  %v53 = vsub.f32 0.0, %v52
  %54 = vst.msk [vmem:[%s3] sm:$0xff] %vm39, %v53
  // Predicated region
  $region10: #{tpu_custom_call.1} parent=0 // pred_check
    _
  $region11: #{tpu_custom_call.1} parent=0 // pred_check_branch
    %56 = sbr.rel (0) target = $region13
  $region12: #{tpu_custom_call.1} parent=0 // pred_region
    _
  $region13: #{tpu_custom_call.1} parent=0 // pred_fallthru
    _
  // Predicated region
  $region14: #{tpu_custom_call.1} parent=0 // pred_check
    _
  $region15: #{tpu_custom_call.1} parent=0 // pred_check_branch
    %58 = sbr.rel (0) target = $region17
  $region16: #{tpu_custom_call.1} parent=0 // pred_region
    _
  $region17: #{tpu_custom_call.1} parent=0 // pred_fallthru
    _
  // Predicated region
  $region18: #{tpu_custom_call.1} parent=0 // pred_check
    _
  $region19: #{tpu_custom_call.1} parent=0 // pred_check_branch
    %60 = sbr.rel (0) target = $region21
  $region20: #{tpu_custom_call.1} parent=0 // pred_region
    _
  $region21: #{tpu_custom_call.1} parent=0 // pred_fallthru
    _
  // Predicated region
  $region22: #{tpu_custom_call.1} parent=0 // pred_check
    _
  $region23: #{tpu_custom_call.1} parent=0 // pred_check_branch
    %62 = sbr.rel (0) target = $region25
  $region24: #{tpu_custom_call.1} parent=0 // pred_region
    _
  $region25: #{tpu_custom_call.1} parent=0 // pred_fallthru
    _

</llo_original>
